<compile_context>
chip_gen: v7x
topology: tpu7x:2x2x1
jax: 0.10.0
libtpu: 0.0.40
codegen_flags: <defaults>
</compile_context>

<pallas_src>
import functools

import jax
import jax.numpy as jnp
from jax.experimental import pallas as pl
from jax.experimental.pallas import tpu as pltpu  # noqa: F401  (TPU backend)


# ------------------------------ Pallas kernel -------------------------------

def _bbox_head_kernel(*refs, has_text):
    """Fused: mean over frames -> MLP(D, D, 4) -> sigmoid -> cxcywh->xyxy.

    refs (no text):   vid, w1, b1, w2, b2, w3, b3, cvt, out
    refs (with text): vid, txt, w1_vid, w1_txt, b1, w2, b2, w3, b3, cvt, out
    """
    if has_text:
        (vid_ref, txt_ref, w1v_ref, w1t_ref, b1_ref,
         w2_ref, b2_ref, w3_ref, b3_ref, cvt_ref, o_ref) = refs
    else:
        (vid_ref, w1v_ref, b1_ref,
         w2_ref, b2_ref, w3_ref, b3_ref, cvt_ref, o_ref) = refs

    # vid_feats.mean(1): sublane reduction over the frame axis (XLU).
    x = jnp.mean(vid_ref[...].astype(jnp.float32), axis=1)            # [B, Dv]

    # Layer 1 (+ReLU). torch.cat((pooled, text), -1) @ W1 is computed as a
    # split matmul so no in-kernel lane concatenation is needed.
    h = jnp.dot(x, w1v_ref[...], preferred_element_type=jnp.float32)
    if has_text:
        h = h + jnp.dot(txt_ref[...].astype(jnp.float32), w1t_ref[...],
                        preferred_element_type=jnp.float32)
    h = jnp.maximum(h + b1_ref[...], 0.0)                              # [B, D]

    # Layer 2 (+ReLU).
    h = jnp.dot(h, w2_ref[...], preferred_element_type=jnp.float32) + b2_ref[...]
    h = jnp.maximum(h, 0.0)                                            # [B, D]

    # Layer 3 (no activation) -> sigmoid -> (cx, cy, w, h) in (0, 1).
    logits = jnp.dot(h, w3_ref[...], preferred_element_type=jnp.float32) + b3_ref[...]
    p = jax.nn.sigmoid(logits)                                         # [B, 4]

    # box_cxcywh_to_xyxy as a tiny linear map; the 4x4 matrix is a kernel
    # INPUT (array constants may not be captured by the kernel body).
    o_ref[...] = jnp.dot(p, cvt_ref[...],
                         preferred_element_type=jnp.float32).astype(o_ref.dtype)


# columns of the output are (x0, y0, x1, y1) = (cx-0.5w, cy-0.5h, cx+0.5w, cy+0.5h)
_CXCYWH_TO_XYXY = [[1.0, 0.0, 1.0, 0.0],
                   [0.0, 1.0, 0.0, 1.0],
                   [-0.5, 0.0, 0.5, 0.0],
                   [0.0, -0.5, 0.0, 0.5]]


# --------------------------------- wrapper ----------------------------------

def bbox_pred_head_with_text(vid_feats, params, text_feats=None):
    """Pallas forward of bbox_Pred_Head_with_text.

    vid_feats:  [B, T, Dv] float32
    text_feats: optional [B, Dt] float32 (then Dv + Dt == img_feature_dim)
    returns:    [B, 4] xyxy boxes in (0, 1)
    """
    b = vid_feats.shape[0]
    d_in = params["w1"].shape[0]              # img_feature_dim (= Dv [+ Dt])
    cvt = jnp.asarray(_CXCYWH_TO_XYXY, dtype=jnp.float32)

    if text_feats is None:
        assert vid_feats.shape[-1] == d_in
        args = (vid_feats, params["w1"], params["b1"],
                params["w2"], params["b2"], params["w3"], params["b3"], cvt)
    else:
        dv = vid_feats.shape[-1]
        assert dv + text_feats.shape[-1] == d_in
        args = (vid_feats, text_feats,
                params["w1"][:dv], params["w1"][dv:], params["b1"],
                params["w2"], params["b2"], params["w3"], params["b3"], cvt)

    return pl.pallas_call(
        functools.partial(_bbox_head_kernel, has_text=text_feats is not None),
        out_shape=jax.ShapeDtypeStruct((b, 4), jnp.float32),
    )(*args)


# --------------------------- params / reference -----------------------------

def init_params(key, img_feature_dim):
    d = img_feature_dim
    k1, k2, k3, k4, k5, k6 = jax.random.split(key, 6)

    def w(k, shape):
        return 0.05 * jax.random.normal(k, shape, dtype=jnp.float32)

    return {
        "w1": w(k1, (d, d)), "b1": 0.01 * jax.random.normal(k2, (1, d), jnp.float32),
        "w2": w(k3, (d, d)), "b2": 0.01 * jax.random.normal(k4, (1, d), jnp.float32),
        "w3": w(k5, (d, 4)), "b3": 0.01 * jax.random.normal(k6, (1, 4), jnp.float32),
    }


def reference_forward(vid_feats, params, text_feats=None):
    """Plain-JAX mirror of the PyTorch module (for correctness checking)."""
    x = jnp.mean(vid_feats, axis=1)
    if text_feats is not None:
        x = jnp.concatenate([x, text_feats], axis=-1)
    h = jax.nn.relu(x @ params["w1"] + params["b1"])
    h = jax.nn.relu(h @ params["w2"] + params["b2"])
    p = jax.nn.sigmoid(h @ params["w3"] + params["b3"])
    cx, cy, w, hh = p[..., 0], p[..., 1], p[..., 2], p[..., 3]
    return jnp.stack([cx - 0.5 * w, cy - 0.5 * hh, cx + 0.5 * w, cy + 0.5 * hh], axis=-1)


# ----------------------------------- main ------------------------------------

if __name__ == "__main__":
    key = jax.random.PRNGKey(0)
    kp, kv1, kv2, kt = jax.random.split(key, 4)

    D = 128                      # img_feature_dim (MLP input dim), lane-dense
    B, T = 2, 8
    params = init_params(kp, D)

    # --- path 1: text_feats=None (video feature dim == img_feature_dim) ---
    vid1 = jax.random.normal(kv1, (B, T, D), dtype=jnp.float32)
    out1 = jax.block_until_ready(bbox_pred_head_with_text(vid1, params))
    ref1 = reference_forward(vid1, params)
    assert out1.shape == (B, 4) and out1.dtype == jnp.float32
    assert jnp.allclose(out1, ref1, atol=2e-2), float(jnp.max(jnp.abs(out1 - ref1)))

    # --- path 2: with text_feats (Dv + Dt == img_feature_dim) ---
    Dv, Dt = 96, 32
    vid2 = jax.random.normal(kv2, (B, T, Dv), dtype=jnp.float32)
    txt = jax.random.normal(kt, (B, Dt), dtype=jnp.float32)
    out2 = jax.block_until_ready(bbox_pred_head_with_text(vid2, params, text_feats=txt))
    ref2 = reference_forward(vid2, params, text_feats=txt)
    assert out2.shape == (B, 4) and out2.dtype == jnp.float32
    assert jnp.allclose(out2, ref2, atol=2e-2), float(jnp.max(jnp.abs(out2 - ref2)))

    print("KERNEL_OK")
</pallas_src>

<mosaic_0001>
module attributes {stable_mosaic.version = 11 : i64} {
  func.func @_bbox_head_kernel(%arg0: memref<2x8x128xf32, #tpu.memory_space<vmem>>, %arg1: memref<128x128xf32, #tpu.memory_space<vmem>>, %arg2: memref<1x128xf32, #tpu.memory_space<vmem>>, %arg3: memref<128x128xf32, #tpu.memory_space<vmem>>, %arg4: memref<1x128xf32, #tpu.memory_space<vmem>>, %arg5: memref<128x4xf32, #tpu.memory_space<vmem>>, %arg6: memref<1x4xf32, #tpu.memory_space<vmem>>, %arg7: memref<4x4xf32, #tpu.memory_space<vmem>>, %arg8: memref<2x4xf32, #tpu.memory_space<vmem>>) attributes {dimension_semantics = [], scalar_prefetch = 0 : i64, scratch_operands = 0 : i64, tpu.core_type = #tpu.core_type<tc>} {
    %c0 = arith.constant 0 : index
    %c0_0 = arith.constant 0 : index
    %c0_1 = arith.constant 0 : index
    %0 = vector.load %arg0[%c0, %c0_0, %c0_1] : memref<2x8x128xf32, #tpu.memory_space<vmem>>, vector<2x8x128xf32>
    %cst = arith.constant dense<0.000000e+00> : vector<2x128xf32>
    %1 = vector.multi_reduction <add>, %0, %cst [1] : vector<2x8x128xf32> to vector<2x128xf32>
    %cst_2 = arith.constant 8.000000e+00 : f32
    %2 = vector.broadcast %cst_2 : f32 to vector<2x128xf32>
    %3 = arith.divf %1, %2 : vector<2x128xf32>
    %c0_3 = arith.constant 0 : index
    %c0_4 = arith.constant 0 : index
    %4 = vector.load %arg1[%c0_3, %c0_4] : memref<128x128xf32, #tpu.memory_space<vmem>>, vector<128x128xf32>
    %cst_5 = arith.constant dense<0.000000e+00> : vector<2x128xf32>
    %5 = tpu.matmul %3, %4, %cst_5 {dimension_numbers = #tpu.dot_dimension_numbers<[1], [0], [0], [1], [0, 0, 1, 1], [], []>} : vector<2x128xf32>, vector<128x128xf32>, vector<2x128xf32> -> vector<2x128xf32>
    %c0_6 = arith.constant 0 : index
    %c0_7 = arith.constant 0 : index
    %6 = vector.load %arg2[%c0_6, %c0_7] : memref<1x128xf32, #tpu.memory_space<vmem>>, vector<1x128xf32>
    %7 = vector.broadcast %6 : vector<1x128xf32> to vector<2x128xf32>
    %8 = arith.addf %5, %7 : vector<2x128xf32>
    %cst_8 = arith.constant 0.000000e+00 : f32
    %9 = vector.broadcast %cst_8 : f32 to vector<2x128xf32>
    %10 = arith.maximumf %8, %9 : vector<2x128xf32>
    %c0_9 = arith.constant 0 : index
    %c0_10 = arith.constant 0 : index
    %11 = vector.load %arg3[%c0_9, %c0_10] : memref<128x128xf32, #tpu.memory_space<vmem>>, vector<128x128xf32>
    %cst_11 = arith.constant dense<0.000000e+00> : vector<2x128xf32>
    %12 = tpu.matmul %10, %11, %cst_11 {dimension_numbers = #tpu.dot_dimension_numbers<[1], [0], [0], [1], [0, 0, 1, 1], [], []>} : vector<2x128xf32>, vector<128x128xf32>, vector<2x128xf32> -> vector<2x128xf32>
    %c0_12 = arith.constant 0 : index
    %c0_13 = arith.constant 0 : index
    %13 = vector.load %arg4[%c0_12, %c0_13] : memref<1x128xf32, #tpu.memory_space<vmem>>, vector<1x128xf32>
    %14 = vector.broadcast %13 : vector<1x128xf32> to vector<2x128xf32>
    %15 = arith.addf %12, %14 : vector<2x128xf32>
    %cst_14 = arith.constant 0.000000e+00 : f32
    %16 = vector.broadcast %cst_14 : f32 to vector<2x128xf32>
    %17 = arith.maximumf %15, %16 : vector<2x128xf32>
    %c0_15 = arith.constant 0 : index
    %c0_16 = arith.constant 0 : index
    %18 = vector.load %arg5[%c0_15, %c0_16] : memref<128x4xf32, #tpu.memory_space<vmem>>, vector<128x4xf32>
    %cst_17 = arith.constant dense<0.000000e+00> : vector<2x4xf32>
    %19 = tpu.matmul %17, %18, %cst_17 {dimension_numbers = #tpu.dot_dimension_numbers<[1], [0], [0], [1], [0, 0, 1, 1], [], []>} : vector<2x128xf32>, vector<128x4xf32>, vector<2x4xf32> -> vector<2x4xf32>
    %c0_18 = arith.constant 0 : index
    %c0_19 = arith.constant 0 : index
    %20 = vector.load %arg6[%c0_18, %c0_19] : memref<1x4xf32, #tpu.memory_space<vmem>>, vector<1x4xf32>
    %21 = vector.broadcast %20 : vector<1x4xf32> to vector<2x4xf32>
    %22 = arith.addf %19, %21 : vector<2x4xf32>
    %23 = arith.negf %22 : vector<2x4xf32>
    %24 = math.exp %23 : vector<2x4xf32>
    %cst_20 = arith.constant 1.000000e+00 : f32
    %25 = vector.broadcast %cst_20 : f32 to vector<2x4xf32>
    %26 = arith.addf %25, %24 : vector<2x4xf32>
    %27 = arith.divf %25, %26 : vector<2x4xf32>
    %c0_21 = arith.constant 0 : index
    %c0_22 = arith.constant 0 : index
    %28 = vector.load %arg7[%c0_21, %c0_22] : memref<4x4xf32, #tpu.memory_space<vmem>>, vector<4x4xf32>
    %cst_23 = arith.constant dense<0.000000e+00> : vector<2x4xf32>
    %29 = tpu.matmul %27, %28, %cst_23 {dimension_numbers = #tpu.dot_dimension_numbers<[1], [0], [0], [1], [0, 0, 1, 1], [], []>} : vector<2x4xf32>, vector<4x4xf32>, vector<2x4xf32> -> vector<2x4xf32>
    %c0_24 = arith.constant 0 : index
    %c0_25 = arith.constant 0 : index
    %30 = vector.load %arg8[%c0_24, %c0_25] : memref<2x4xf32, #tpu.memory_space<vmem>>, vector<2x4xf32>
    tpu.vector_store %arg8[%c0_24, %c0_25], %29 {strides = array<i32>} : memref<2x4xf32, #tpu.memory_space<vmem>>, vector<2x4xf32>,
    return
  }
}

</mosaic_0001>

<llo_original>
// kernel: tpu_custom_call.1
$region0: #{tpu_custom_call.1}
  #allocation0 [shape = 'u32[]', space=smem, size = 0x4, offset = 0x4, fixed_abs, tag = 'smem constant byte address 0x4 - core index']
  #allocation1 [shape = 'u32[144,128]{1,0:T(1,128)}', space=vmem, size = 0x12000, scoped, tag = 'internal scratch']
  %s0 = inlined_call_operand.hbm [shape: f32[2,8,128], index: 0, kind: input, shape index: {}]
  %s1 = inlined_call_operand.vmem [shape: f32[128,128], index: 1, kind: input, shape index: {}]
  %s2 = inlined_call_operand.vmem [shape: f32[1,128], index: 2, kind: input, shape index: {}]
  %s3 = inlined_call_operand.hbm [shape: f32[128,128], index: 3, kind: input, shape index: {}]
  %s4 = inlined_call_operand.vmem [shape: f32[1,128], index: 4, kind: input, shape index: {}]
  %s5 = inlined_call_operand.vmem [shape: f32[128,4], index: 5, kind: input, shape index: {}]
  %s6 = inlined_call_operand.vmem [shape: f32[1,4], index: 6, kind: input, shape index: {}]
  %s7 = inlined_call_operand.vmem [shape: f32[4,4], index: 7, kind: input, shape index: {}]
  %s8 = inlined_call_operand.hbm [shape: f32[2,4], index: 8, kind: output, shape index: {}]
  %s9 = sld [smem:[#allocation0]]
  $region50: #{tpu_custom_call.1} parent=0
    _
  %s11 = ssub.s32 1, %s9
  %s12 = scalar_select 0, %s11, %s9
  $region1: #{tpu_custom_call.1} parent=0
    #allocation2 [shape = 'u8[8192]{0}', space=vmem, size = 0x2000, scoped, tag = 'input window, operand 0, single buffered']
    #allocation3 [shape = 's32[1]{0}', space=sflag, size = 0x4, scoped, tag = 'scoped memory for tpu_custom_call.1']
    #allocation4 [shape = 's32[1]{0}', space=sflag, size = 0x4, scoped, tag = 'scoped memory for tpu_custom_call.1']
    #allocation5 [shape = 'u8[65536]{0}', space=vmem, size = 0x10000, scoped, tag = 'input window, operand 3, single buffered']
    #allocation6 [shape = 's32[1]{0}', space=sflag, size = 0x4, scoped, tag = 'scoped memory for tpu_custom_call.1']
    #allocation7 [shape = 'u8[1024]{0}', space=vmem, size = 0x400, scoped, tag = 'output window, operand 0, single buffered']
    %13 = vsyncpa [#allocation3], 0
    %14 = vsyncpa [#allocation6], 0
    %15 = vsyncpa [#allocation4], 0
    // Predicated region
    $region2: #{tpu_custom_call.1} parent=1 // pred_check
      _
    $region3: #{tpu_custom_call.1} parent=1 // pred_check_branch
      %17 = sbr.rel (0) target = $region5
    $region4: #{tpu_custom_call.1} parent=1 // pred_region
      %s19 = ssub.s32 256, 256
      %20 = vsyncadd [#allocation3], %s19
      %s21 = sshll.u32 [#allocation2], 4
      %s22 = int_to_ptr.vmem [resolvable:$true] %s21
      %27 = dma.hbm_to_vmem [thread:$0]  %s0, 256, %s22, [#allocation3], 128, 128, 8
    $region5: #{tpu_custom_call.1} parent=1 // pred_fallthru
      _
    // Predicated region
    $region6: #{tpu_custom_call.1} parent=1 // pred_check
      _
    $region7: #{tpu_custom_call.1} parent=1 // pred_check_branch
      %29 = sbr.rel (0) target = $region9
    $region8: #{tpu_custom_call.1} parent=1 // pred_region
      _
    $region9: #{tpu_custom_call.1} parent=1 // pred_fallthru
      _
    // Predicated region
    $region10: #{tpu_custom_call.1} parent=1 // pred_check
      _
    $region11: #{tpu_custom_call.1} parent=1 // pred_check_branch
      %31 = sbr.rel (0) target = $region13
    $region12: #{tpu_custom_call.1} parent=1 // pred_region
      _
    $region13: #{tpu_custom_call.1} parent=1 // pred_fallthru
      _
    // Predicated region
    $region14: #{tpu_custom_call.1} parent=1 // pred_check
      _
    $region15: #{tpu_custom_call.1} parent=1 // pred_check_branch
      %33 = sbr.rel (0) target = $region17
    $region16: #{tpu_custom_call.1} parent=1 // pred_region
      %s35 = ssub.s32 2048, 2048
      %36 = vsyncadd [#allocation6], %s35
      %s37 = sshll.u32 [#allocation5], 4
      %s38 = int_to_ptr.vmem [resolvable:$true] %s37
      %43 = dma.hbm_to_vmem [thread:$0]  %s3, 2048, %s38, [#allocation6], 128, 128, 8
    $region17: #{tpu_custom_call.1} parent=1 // pred_fallthru
      _
    // Predicated region
    $region18: #{tpu_custom_call.1} parent=1 // pred_check
      _
    $region19: #{tpu_custom_call.1} parent=1 // pred_check_branch
      %45 = sbr.rel (0) target = $region21
    $region20: #{tpu_custom_call.1} parent=1 // pred_region
      _
    $region21: #{tpu_custom_call.1} parent=1 // pred_fallthru
      _
    // Predicated region
    $region22: #{tpu_custom_call.1} parent=1 // pred_check
      _
    $region23: #{tpu_custom_call.1} parent=1 // pred_check_branch
      %47 = sbr.rel (0) target = $region25
    $region24: #{tpu_custom_call.1} parent=1 // pred_region
      _
    $region25: #{tpu_custom_call.1} parent=1 // pred_fallthru
      _
    // Predicated region
    $region26: #{tpu_custom_call.1} parent=1 // pred_check
      _
    $region27: #{tpu_custom_call.1} parent=1 // pred_check_branch
      %49 = sbr.rel (0) target = $region29
    $region28: #{tpu_custom_call.1} parent=1 // pred_region
      _
    $region29: #{tpu_custom_call.1} parent=1 // pred_fallthru
      _
    // Predicated region
    $region30: #{tpu_custom_call.1} parent=1 // pred_check
      _
    $region31: #{tpu_custom_call.1} parent=1 // pred_check_branch
      %51 = sbr.rel (0) target = $region33
    $region32: #{tpu_custom_call.1} parent=1 // pred_region
      _
    $region33: #{tpu_custom_call.1} parent=1 // pred_fallthru
      _
    // Predicated region
    $region34: #{tpu_custom_call.1} parent=1 // pred_check
      _
    $region35: #{tpu_custom_call.1} parent=1 // pred_check_branch
      %53 = sbr.rel (0) target = $region37
    $region36: #{tpu_custom_call.1} parent=1 // pred_region
      %54 = dma.done [#allocation3], 256
    $region37: #{tpu_custom_call.1} parent=1 // pred_fallthru
      _
    // Predicated region
    $region38: #{tpu_custom_call.1} parent=1 // pred_check
      _
    $region39: #{tpu_custom_call.1} parent=1 // pred_check_branch
      %56 = sbr.rel (0) target = $region41
    $region40: #{tpu_custom_call.1} parent=1 // pred_region
      %57 = dma.done [#allocation6], 2048
    $region41: #{tpu_custom_call.1} parent=1 // pred_fallthru
      _
    %v58 = vld [vmem:[#allocation2] sm:$0xff]
    %v59 = vld [vmem:[#allocation2 + $0x8] sm:$0xff]
    %v60 = vrot.slane %v58, 4
    %v61 = vadd.f32 %v58, %v60
    %v62 = vrot.slane %v61, 2
    %v63 = vadd.f32 %v61, %v62
    %v64 = vrot.slane %v63, 1
    %v65 = vadd.f32 %v63, %v64
    %v66 = vrot.slane %v59, 4
    %v67 = vadd.f32 %v59, %v66
    %v68 = vrot.slane %v67, 2
    %v69 = vadd.f32 %v67, %v68
    %v70 = vrot.slane %v69, 1
    %v71 = vadd.f32 %v69, %v70
    %v72 = vrcp.pop 8.0
    %v73 = vmul.f32 %v65, %v72
    %v74 = vmul.f32 %v71, %v72
    %v75 = vld [vmem:[%s1] sm:$0xff]
    %v76 = vld [vmem:[%s1 + $0x8] sm:$0xff]
    %v77 = vld [vmem:[%s1 + $0x10] sm:$0xff]
    %v78 = vld [vmem:[%s1 + $0x18] sm:$0xff]
    %v79 = vld [vmem:[%s1 + $0x20] sm:$0xff]
    %v80 = vld [vmem:[%s1 + $0x28] sm:$0xff]
    %v81 = vld [vmem:[%s1 + $0x30] sm:$0xff]
    %v82 = vld [vmem:[%s1 + $0x38] sm:$0xff]
    %v83 = vld [vmem:[%s1 + $0x40] sm:$0xff]
    %v84 = vld [vmem:[%s1 + $0x48] sm:$0xff]
    %v85 = vld [vmem:[%s1 + $0x50] sm:$0xff]
    %v86 = vld [vmem:[%s1 + $0x58] sm:$0xff]
    %v87 = vld [vmem:[%s1 + $0x60] sm:$0xff]
    %v88 = vld [vmem:[%s1 + $0x68] sm:$0xff]
    %v89 = vld [vmem:[%s1 + $0x70] sm:$0xff]
    %v90 = vld [vmem:[%s1 + $0x78] sm:$0xff]
    %v91 = vld [vmem:[%s2] sm:$0x1]
    %v93 = vlaneseq
    %v94 = vshrl.u32 %v93, 7
    %v95 = vsub.s32 0, %v94
    %v96 = vrot.slane %v91, %v95
    %vm100 = vcmask 1041409
    %v101 = vsel %vm100, %v74, %v73
    %103 = vmatprep.subr.mxu0 0.0
    %104 = vmatpush1.msra.mxu0 %v75
    %105 = vmatprep.subr.mxu0 0.0
    %106 = vmatpush1.msra.mxu0 %v76
    %107 = vmatprep.subr.mxu0 0.0
    %108 = vmatpush1.msra.mxu0 %v77
    %109 = vmatprep.subr.mxu0 0.0
    %110 = vmatpush1.msra.mxu0 %v78
    %111 = vmatprep.subr.mxu0 0.0
    %112 = vmatpush1.msra.mxu0 %v79
    %113 = vmatprep.subr.mxu0 0.0
    %114 = vmatpush1.msra.mxu0 %v80
    %115 = vmatprep.subr.mxu0 0.0
    %116 = vmatpush1.msra.mxu0 %v81
    %117 = vmatprep.subr.mxu0 0.0
    %118 = vmatpush1.msra.mxu0 %v82
    %119 = vmatprep.subr.mxu0 0.0
    %120 = vmatpush1.msra.mxu0 %v83
    %121 = vmatprep.subr.mxu0 0.0
    %122 = vmatpush1.msra.mxu0 %v84
    %123 = vmatprep.subr.mxu0 0.0
    %124 = vmatpush1.msra.mxu0 %v85
    %125 = vmatprep.subr.mxu0 0.0
    %126 = vmatpush1.msra.mxu0 %v86
    %127 = vmatprep.subr.mxu0 0.0
    %128 = vmatpush1.msra.mxu0 %v87
    %129 = vmatprep.subr.mxu0 0.0
    %130 = vmatpush1.msra.mxu0 %v88
    %131 = vmatprep.subr.mxu0 0.0
    %132 = vmatpush1.msra.mxu0 %v89
    %133 = vmatprep.subr.mxu0 0.0
    %134 = vmatpush1.msra.mxu0 %v90
    %135 = vmatprep.subr.mxu0 0.0
    %136 = vmatpush1.msra.mxu0 0.0
    %137 = vmatprep.subr.mxu0 0.0
    %138 = vmatpush1.msra.mxu0 0.0
    %139 = vmatprep.subr.mxu0 0.0
    %140 = vmatpush1.msra.mxu0 0.0
    %141 = vmatprep.subr.mxu0 0.0
    %142 = vmatpush1.msra.mxu0 0.0
    %143 = vmatprep.subr.mxu0 0.0
    %144 = vmatpush1.msra.mxu0 0.0
    %145 = vmatprep.subr.mxu0 0.0
    %146 = vmatpush1.msra.mxu0 0.0
    %147 = vmatprep.subr.mxu0 0.0
    %148 = vmatpush1.msra.mxu0 0.0
    %149 = vmatprep.subr.mxu0 0.0
    %150 = vmatpush1.msra.mxu0 0.0
    %151 = vmatprep.subr.mxu0 0.0
    %152 = vmatpush1.msra.mxu0 0.0
    %153 = vmatprep.subr.mxu0 0.0
    %154 = vmatpush1.msra.mxu0 0.0
    %155 = vmatprep.subr.mxu0 0.0
    %156 = vmatpush1.msra.mxu0 0.0
    %157 = vmatprep.subr.mxu0 0.0
    %158 = vmatpush1.msra.mxu0 0.0
    %159 = vmatprep.subr.mxu0 0.0
    %160 = vmatpush1.msra.mxu0 0.0
    %161 = vmatprep.subr.mxu0 0.0
    %162 = vmatpush1.msra.mxu0 0.0
    %163 = vmatprep.subr.mxu0 0.0
    %164 = vmatpush1.msra.mxu0 0.0
    %165 = vmatprep.subr.mxu0 0.0
    %166 = vmatpush1.msra.mxu0 0.0
    %167 = vmatprep.mubr.f32.mxu0 0.0
    %168 = vmatmul.mubr.f32.gmra.mrb[0].mxu0 %v101
    %v169 = vpop.f32.mrb[0].mxu0
    %v170 = vadd.f32 %v96, %v169
    %v171 = vpop.f32.mrb[0].mxu0
    %172 = vdwg.mxu0
    %v173 = vmax.f32 %v170, 0.0
    %v174 = vld [vmem:[#allocation5] sm:$0xff]
    %v175 = vld [vmem:[#allocation5 + $0x8] sm:$0xff]
    %v176 = vld [vmem:[#allocation5 + $0x10] sm:$0xff]
    %v177 = vld [vmem:[#allocation5 + $0x18] sm:$0xff]
    %v178 = vld [vmem:[#allocation5 + $0x20] sm:$0xff]
    %v179 = vld [vmem:[#allocation5 + $0x28] sm:$0xff]
    %v180 = vld [vmem:[#allocation5 + $0x30] sm:$0xff]
    %v181 = vld [vmem:[#allocation5 + $0x38] sm:$0xff]
    %v182 = vld [vmem:[#allocation5 + $0x40] sm:$0xff]
    %v183 = vld [vmem:[#allocation5 + $0x48] sm:$0xff]
    %v184 = vld [vmem:[#allocation5 + $0x50] sm:$0xff]
    %v185 = vld [vmem:[#allocation5 + $0x58] sm:$0xff]
    %v186 = vld [vmem:[#allocation5 + $0x60] sm:$0xff]
    %v187 = vld [vmem:[#allocation5 + $0x68] sm:$0xff]
    %v188 = vld [vmem:[#allocation5 + $0x70] sm:$0xff]
    %v189 = vld [vmem:[#allocation5 + $0x78] sm:$0xff]
    %v190 = vld [vmem:[%s4] sm:$0x1]
    %v192 = vlaneseq
    %v193 = vshrl.u32 %v192, 7
    %v194 = vsub.s32 0, %v193
    %v195 = vrot.slane %v190, %v194
    %197 = vmatprep.subr.mxu0 0.0
    %198 = vmatpush1.msra.mxu0 %v174
    %199 = vmatprep.subr.mxu0 0.0
    %200 = vmatpush1.msra.mxu0 %v175
    %201 = vmatprep.subr.mxu0 0.0
    %202 = vmatpush1.msra.mxu0 %v176
    %203 = vmatprep.subr.mxu0 0.0
    %204 = vmatpush1.msra.mxu0 %v177
    %205 = vmatprep.subr.mxu0 0.0
    %206 = vmatpush1.msra.mxu0 %v178
    %207 = vmatprep.subr.mxu0 0.0
    %208 = vmatpush1.msra.mxu0 %v179
    %209 = vmatprep.subr.mxu0 0.0
    %210 = vmatpush1.msra.mxu0 %v180
    %211 = vmatprep.subr.mxu0 0.0
    %212 = vmatpush1.msra.mxu0 %v181
    %213 = vmatprep.subr.mxu0 0.0
    %214 = vmatpush1.msra.mxu0 %v182
    %215 = vmatprep.subr.mxu0 0.0
    %216 = vmatpush1.msra.mxu0 %v183
    %217 = vmatprep.subr.mxu0 0.0
    %218 = vmatpush1.msra.mxu0 %v184
    %219 = vmatprep.subr.mxu0 0.0
    %220 = vmatpush1.msra.mxu0 %v185
    %221 = vmatprep.subr.mxu0 0.0
    %222 = vmatpush1.msra.mxu0 %v186
    %223 = vmatprep.subr.mxu0 0.0
    %224 = vmatpush1.msra.mxu0 %v187
    %225 = vmatprep.subr.mxu0 0.0
    %226 = vmatpush1.msra.mxu0 %v188
    %227 = vmatprep.subr.mxu0 0.0
    %228 = vmatpush1.msra.mxu0 %v189
    %229 = vmatprep.subr.mxu0 0.0
    %230 = vmatpush1.msra.mxu0 0.0
    %231 = vmatprep.subr.mxu0 0.0
    %232 = vmatpush1.msra.mxu0 0.0
    %233 = vmatprep.subr.mxu0 0.0
    %234 = vmatpush1.msra.mxu0 0.0
    %235 = vmatprep.subr.mxu0 0.0
    %236 = vmatpush1.msra.mxu0 0.0
    %237 = vmatprep.subr.mxu0 0.0
    %238 = vmatpush1.msra.mxu0 0.0
    %239 = vmatprep.subr.mxu0 0.0
    %240 = vmatpush1.msra.mxu0 0.0
    %241 = vmatprep.subr.mxu0 0.0
    %242 = vmatpush1.msra.mxu0 0.0
    %243 = vmatprep.subr.mxu0 0.0
    %244 = vmatpush1.msra.mxu0 0.0
    %245 = vmatprep.subr.mxu0 0.0
    %246 = vmatpush1.msra.mxu0 0.0
    %247 = vmatprep.subr.mxu0 0.0
    %248 = vmatpush1.msra.mxu0 0.0
    %249 = vmatprep.subr.mxu0 0.0
    %250 = vmatpush1.msra.mxu0 0.0
    %251 = vmatprep.subr.mxu0 0.0
    %252 = vmatpush1.msra.mxu0 0.0
    %253 = vmatprep.subr.mxu0 0.0
    %254 = vmatpush1.msra.mxu0 0.0
    %255 = vmatprep.subr.mxu0 0.0
    %256 = vmatpush1.msra.mxu0 0.0
    %257 = vmatprep.subr.mxu0 0.0
    %258 = vmatpush1.msra.mxu0 0.0
    %259 = vmatprep.subr.mxu0 0.0
    %260 = vmatpush1.msra.mxu0 0.0
    %261 = vmatprep.mubr.f32.mxu0 0.0
    %262 = vmatmul.mubr.f32.gmra.mrb[0].mxu0 %v173
    %v263 = vpop.f32.mrb[0].mxu0
    %v264 = vadd.f32 %v195, %v263
    %v265 = vpop.f32.mrb[0].mxu0
    %266 = vdwg.mxu0
    %v267 = vmax.f32 %v264, 0.0
    %v268 = vld [vmem:[%s5] sm:$0xff]
    %v269 = vld [vmem:[%s5 + $0x8] sm:$0xff]
    %v270 = vld [vmem:[%s5 + $0x10] sm:$0xff]
    %v271 = vld [vmem:[%s5 + $0x18] sm:$0xff]
    %v272 = vld [vmem:[%s5 + $0x20] sm:$0xff]
    %v273 = vld [vmem:[%s5 + $0x28] sm:$0xff]
    %v274 = vld [vmem:[%s5 + $0x30] sm:$0xff]
    %v275 = vld [vmem:[%s5 + $0x38] sm:$0xff]
    %v276 = vld [vmem:[%s5 + $0x40] sm:$0xff]
    %v277 = vld [vmem:[%s5 + $0x48] sm:$0xff]
    %v278 = vld [vmem:[%s5 + $0x50] sm:$0xff]
    %v279 = vld [vmem:[%s5 + $0x58] sm:$0xff]
    %v280 = vld [vmem:[%s5 + $0x60] sm:$0xff]
    %v281 = vld [vmem:[%s5 + $0x68] sm:$0xff]
    %v282 = vld [vmem:[%s5 + $0x70] sm:$0xff]
    %v283 = vld [vmem:[%s5 + $0x78] sm:$0xff]
    %v284 = vld [vmem:[%s6] sm:$0x1]
    %v286 = vlaneseq
    %v287 = vshrl.u32 %v286, 7
    %v288 = vsub.s32 0, %v287
    %v289 = vrot.slane %v284, %v288
    %291 = vmatprep.subr.mxu0 0.0
    %292 = vmatpush1.msra.mxu0 %v268
    %293 = vmatprep.subr.mxu0 0.0
    %294 = vmatpush1.msra.mxu0 %v269
    %295 = vmatprep.subr.mxu0 0.0
    %296 = vmatpush1.msra.mxu0 %v270
    %297 = vmatprep.subr.mxu0 0.0
    %298 = vmatpush1.msra.mxu0 %v271
    %299 = vmatprep.subr.mxu0 0.0
    %300 = vmatpush1.msra.mxu0 %v272
    %301 = vmatprep.subr.mxu0 0.0
    %302 = vmatpush1.msra.mxu0 %v273
    %303 = vmatprep.subr.mxu0 0.0
    %304 = vmatpush1.msra.mxu0 %v274
    %305 = vmatprep.subr.mxu0 0.0
    %306 = vmatpush1.msra.mxu0 %v275
    %307 = vmatprep.subr.mxu0 0.0
    %308 = vmatpush1.msra.mxu0 %v276
    %309 = vmatprep.subr.mxu0 0.0
    %310 = vmatpush1.msra.mxu0 %v277
    %311 = vmatprep.subr.mxu0 0.0
    %312 = vmatpush1.msra.mxu0 %v278
    %313 = vmatprep.subr.mxu0 0.0
    %314 = vmatpush1.msra.mxu0 %v279
    %315 = vmatprep.subr.mxu0 0.0
    %316 = vmatpush1.msra.mxu0 %v280
    %317 = vmatprep.subr.mxu0 0.0
    %318 = vmatpush1.msra.mxu0 %v281
    %319 = vmatprep.subr.mxu0 0.0
    %320 = vmatpush1.msra.mxu0 %v282
    %321 = vmatprep.subr.mxu0 0.0
    %322 = vmatpush1.msra.mxu0 %v283
    %323 = vmatprep.subr.mxu0 0.0
    %324 = vmatpush1.msra.mxu0 0.0
    %325 = vmatprep.subr.mxu0 0.0
    %326 = vmatpush1.msra.mxu0 0.0
    %327 = vmatprep.subr.mxu0 0.0
    %328 = vmatpush1.msra.mxu0 0.0
    %329 = vmatprep.subr.mxu0 0.0
    %330 = vmatpush1.msra.mxu0 0.0
    %331 = vmatprep.subr.mxu0 0.0
    %332 = vmatpush1.msra.mxu0 0.0
    %333 = vmatprep.subr.mxu0 0.0
    %334 = vmatpush1.msra.mxu0 0.0
    %335 = vmatprep.subr.mxu0 0.0
    %336 = vmatpush1.msra.mxu0 0.0
    %337 = vmatprep.subr.mxu0 0.0
    %338 = vmatpush1.msra.mxu0 0.0
    %339 = vmatprep.subr.mxu0 0.0
    %340 = vmatpush1.msra.mxu0 0.0
    %341 = vmatprep.subr.mxu0 0.0
    %342 = vmatpush1.msra.mxu0 0.0
    %343 = vmatprep.subr.mxu0 0.0
    %344 = vmatpush1.msra.mxu0 0.0
    %345 = vmatprep.subr.mxu0 0.0
    %346 = vmatpush1.msra.mxu0 0.0
    %347 = vmatprep.subr.mxu0 0.0
    %348 = vmatpush1.msra.mxu0 0.0
    %349 = vmatprep.subr.mxu0 0.0
    %350 = vmatpush1.msra.mxu0 0.0
    %351 = vmatprep.subr.mxu0 0.0
    %352 = vmatpush1.msra.mxu0 0.0
    %353 = vmatprep.subr.mxu0 0.0
    %354 = vmatpush1.msra.mxu0 0.0
    %355 = vmatprep.mubr.f32.mxu0 0.0
    %356 = vmatmul.mubr.f32.gmra.mrb[0].mxu0 %v267
    %v357 = vpop.f32.mrb[0].mxu0
    %v358 = vadd.f32 %v289, %v357
    %v359 = vpop.f32.mrb[0].mxu0
    %360 = vdwg.mxu0
    %v361 = vxor.u32 %v358, 2147483648
    %v362 = vmul.f32 %v361, 1.442695
    %v363 = vpow.pop %v362
    %v364 = vadd.f32 %v363, 1.0
    %v365 = vrcp.pop %v364
    %v366 = vmul.f32 1.0, %v365
    %v367 = vld [vmem:[%s7] sm:$0xf]
    %vm368 = vcmask 31744
    %v370 = vsel %vm368, %v366, 0
    %vm372 = vcmask 1043456
    %v374 = vsel %vm372, %v367, 0
    %376 = vmatprep.subr.mxu0 0.0
    %377 = vmatpush1.msra.mxu0 %v374
    %378 = vmatprep.subr.mxu0 0.0
    %379 = vmatpush1.msra.mxu0 0.0
    %380 = vmatprep.subr.mxu0 0.0
    %381 = vmatpush1.msra.mxu0 0.0
    %382 = vmatprep.subr.mxu0 0.0
    %383 = vmatpush1.msra.mxu0 0.0
    %384 = vmatprep.subr.mxu0 0.0
    %385 = vmatpush1.msra.mxu0 0.0
    %386 = vmatprep.subr.mxu0 0.0
    %387 = vmatpush1.msra.mxu0 0.0
    %388 = vmatprep.subr.mxu0 0.0
    %389 = vmatpush1.msra.mxu0 0.0
    %390 = vmatprep.subr.mxu0 0.0
    %391 = vmatpush1.msra.mxu0 0.0
    %392 = vmatprep.subr.mxu0 0.0
    %393 = vmatpush1.msra.mxu0 0.0
    %394 = vmatprep.subr.mxu0 0.0
    %395 = vmatpush1.msra.mxu0 0.0
    %396 = vmatprep.subr.mxu0 0.0
    %397 = vmatpush1.msra.mxu0 0.0
    %398 = vmatprep.subr.mxu0 0.0
    %399 = vmatpush1.msra.mxu0 0.0
    %400 = vmatprep.subr.mxu0 0.0
    %401 = vmatpush1.msra.mxu0 0.0
    %402 = vmatprep.subr.mxu0 0.0
    %403 = vmatpush1.msra.mxu0 0.0
    %404 = vmatprep.subr.mxu0 0.0
    %405 = vmatpush1.msra.mxu0 0.0
    %406 = vmatprep.subr.mxu0 0.0
    %407 = vmatpush1.msra.mxu0 0.0
    %408 = vmatprep.subr.mxu0 0.0
    %409 = vmatpush1.msra.mxu0 0.0
    %410 = vmatprep.subr.mxu0 0.0
    %411 = vmatpush1.msra.mxu0 0.0
    %412 = vmatprep.subr.mxu0 0.0
    %413 = vmatpush1.msra.mxu0 0.0
    %414 = vmatprep.subr.mxu0 0.0
    %415 = vmatpush1.msra.mxu0 0.0
    %416 = vmatprep.subr.mxu0 0.0
    %417 = vmatpush1.msra.mxu0 0.0
    %418 = vmatprep.subr.mxu0 0.0
    %419 = vmatpush1.msra.mxu0 0.0
    %420 = vmatprep.subr.mxu0 0.0
    %421 = vmatpush1.msra.mxu0 0.0
    %422 = vmatprep.subr.mxu0 0.0
    %423 = vmatpush1.msra.mxu0 0.0
    %424 = vmatprep.subr.mxu0 0.0
    %425 = vmatpush1.msra.mxu0 0.0
    %426 = vmatprep.subr.mxu0 0.0
    %427 = vmatpush1.msra.mxu0 0.0
    %428 = vmatprep.subr.mxu0 0.0
    %429 = vmatpush1.msra.mxu0 0.0
    %430 = vmatprep.subr.mxu0 0.0
    %431 = vmatpush1.msra.mxu0 0.0
    %432 = vmatprep.subr.mxu0 0.0
    %433 = vmatpush1.msra.mxu0 0.0
    %434 = vmatprep.subr.mxu0 0.0
    %435 = vmatpush1.msra.mxu0 0.0
    %436 = vmatprep.subr.mxu0 0.0
    %437 = vmatpush1.msra.mxu0 0.0
    %438 = vmatprep.subr.mxu0 0.0
    %439 = vmatpush1.msra.mxu0 0.0
    %440 = vmatprep.mubr.f32.mxu0 0.0
    %441 = vmatmul.mubr.f32.gmra.mrb[0].mxu0 %v370
    %v442 = vpop.f32.mrb[0].mxu0
    %v443 = vadd.f32 0.0, %v442
    %v444 = vpop.f32.mrb[0].mxu0
    %445 = vdwg.mxu0
    %vm446 = vcmask 25600
    %447 = vst.msk [vmem:[#allocation7] sm:$0x3] %vm446, %v443
    // Predicated region
    $region42: #{tpu_custom_call.1} parent=1 // pred_check
      _
    $region43: #{tpu_custom_call.1} parent=1 // pred_check_branch
      %449 = sbr.rel (0) target = $region45
    $region44: #{tpu_custom_call.1} parent=1 // pred_region
      %s451 = ssub.s32 32, 32
      %452 = vsyncadd [#allocation4], %s451
      %s454 = sshll.u32 [#allocation7], 4
      %s455 = int_to_ptr.vmem [resolvable:$true] %s454
      %457 = dma.vmem_to_hbm [thread:$0]  %s455, 32, %s8, [#allocation4]
    $region45: #{tpu_custom_call.1} parent=1 // pred_fallthru
      _
    // Predicated region
    $region46: #{tpu_custom_call.1} parent=1 // pred_check
      _
    $region47: #{tpu_custom_call.1} parent=1 // pred_check_branch
      %459 = sbr.rel (0) target = $region49
    $region48: #{tpu_custom_call.1} parent=1 // pred_region
      %460 = dma.done [#allocation4], 32
    $region49: #{tpu_custom_call.1} parent=1 // pred_fallthru
      _
    %461 = vsyncpa [#allocation3], 1
    %462 = vsyncpa [#allocation6], 1
    %463 = vsyncpa [#allocation4], 1

</llo_original>
